<compile_context>
chip_gen: v6e
topology: v6e:2x2x1
jax: 0.10.0
libtpu: 0.0.40
codegen_flags: <defaults>
</compile_context>

<pallas_src>
import jax
import jax.numpy as jnp
from jax.experimental import pallas as pl
from jax.experimental.pallas import tpu as pltpu


def _round_up(n, m):
    return ((n + m - 1) // m) * m


def simple_nn_kernel(x_ref, w1_ref, b1_ref, w2_ref, b2_ref, w3_ref, b3_ref, o_ref):
    # Hoist bias / small-weight reads once (JAX does not CSE broadcasts; cheap guard
    # in case this body is ever wrapped in an in-kernel loop).
    b1 = b1_ref[...]          # (1, 64)
    b2 = b2_ref[...]          # (1, 32)
    w3 = w3_ref[...]          # (1, 32)  fc3 weight as a row
    b3 = b3_ref[...]          # (1, 1)

    # ---- fc1 + ReLU (MXU) ----
    h1 = jnp.dot(x_ref[...], w1_ref[...], preferred_element_type=jnp.float32)
    h1 = jnp.maximum(h1 + b1, 0.0)                       # (TB, 64)

    # ---- fc2 + ReLU (MXU) ----
    h2 = jnp.dot(h1, w2_ref[...], preferred_element_type=jnp.float32)
    h2 = jnp.maximum(h2 + b2, 0.0)                       # (TB, 32)

    # ---- fc3 (N=1): VPU broadcast-multiply + lane reduce instead of an MXU matmul ----
    z = jnp.sum(h2 * w3, axis=-1, keepdims=True) + b3    # (TB, 1)

    # ---- Sigmoid: exp on EUP, approximate reciprocal on EUP (frees VALU slots) ----
    o_ref[...] = pl.reciprocal(1.0 + jnp.exp(-z), approx=True).astype(o_ref.dtype)


def simple_nn_forward(x, params, *, block_b=512):
    """x: (B, F) float32 -> (B, 1) float32. Tiles the batch axis over a parallel grid."""
    w1, b1, w2, b2, w3_row, b3 = params
    B, F = x.shape

    # Batch tile: as large as useful (default 512), clamped down for small batches.
    tb = min(block_b, _round_up(B, 8))
    tb = _round_up(tb, 8)
    b_pad = _round_up(B, tb)
    if b_pad != B:
        x = jnp.pad(x, ((0, b_pad - B), (0, 0)))
    grid = (pl.cdiv(b_pad, tb),)

    # Weights/biases: same block every grid step -> stay resident in VMEM (no re-DMA).
    resident = lambda shape: pl.BlockSpec(shape, lambda i: (0, 0))

    out = pl.pallas_call(
        simple_nn_kernel,
        out_shape=jax.ShapeDtypeStruct((b_pad, 1), jnp.float32),
        grid=grid,
        in_specs=[
            pl.BlockSpec((tb, F), lambda i: (i, 0)),      # x streams through VMEM
            resident(w1.shape), resident(b1.shape),
            resident(w2.shape), resident(b2.shape),
            resident(w3_row.shape), resident(b3.shape),
        ],
        out_specs=pl.BlockSpec((tb, 1), lambda i: (i, 0)),
        compiler_params=pltpu.CompilerParams(
            dimension_semantics=("parallel",),            # megacore / v7x dual-TC sharding
            vmem_limit_bytes=32 * 1024 * 1024,            # safe on v5e/v6e/v7x
        ),
    )(x, w1, b1, w2, b2, w3_row, b3)
    return out[:B]


def init_params(key, input_size):
    """Deterministic init matching PyTorch nn.Linear default (U[-1/sqrt(fan_in), +1/sqrt(fan_in)])."""
    def linear(k, fan_in, fan_out):
        kw, kb = jax.random.split(k)
        bound = 1.0 / jnp.sqrt(fan_in)
        w = jax.random.uniform(kw, (fan_in, fan_out), jnp.float32, -bound, bound)
        b = jax.random.uniform(kb, (1, fan_out), jnp.float32, -bound, bound)
        return w, b

    k1, k2, k3 = jax.random.split(key, 3)
    w1, b1 = linear(k1, input_size, 64)
    w2, b2 = linear(k2, 64, 32)
    w3, b3 = linear(k3, 32, 1)
    return (w1, b1, w2, b2, w3.T, b3)   # fc3 weight kept as a (1, 32) row


def reference_forward(x, params):
    w1, b1, w2, b2, w3_row, b3 = params
    h = jnp.maximum(x @ w1 + b1, 0.0)
    h = jnp.maximum(h @ w2 + b2, 0.0)
    return jax.nn.sigmoid(h @ w3_row.T + b3)


if __name__ == "__main__":
    key = jax.random.PRNGKey(0)
    k_x, k_p = jax.random.split(key)

    batch = 50         # deliberately not a multiple of the tile, to exercise padding
    input_size = 16    # stands in for X_tensor.shape[1] (tabular feature count)

    x = jax.random.normal(k_x, (batch, input_size), jnp.float32)  # standardized features
    params = init_params(k_p, input_size)

    # Small block_b so the demo runs a multi-step grid (production default is 512).
    out = simple_nn_forward(x, params, block_b=16)
    out = jax.block_until_ready(out)

    ref = reference_forward(x, params)
    assert out.shape == (batch, 1), out.shape
    # approx=True EUP reciprocal in the sigmoid => ~1e-4-level absolute error bound;
    # tolerance relaxed accordingly (outputs are in [0, 1]).
    err = float(jnp.max(jnp.abs(out - ref)))
    assert jnp.allclose(out, ref, atol=5e-3, rtol=5e-3), f"mismatch vs reference, max abs err {err}"

    print("KERNEL_OK")
</pallas_src>

<mosaic_0001>
module attributes {stable_mosaic.version = 11 : i64} {
  func.func @simple_nn_kernel(%arg0: i32, %arg1: memref<16x16xf32, #tpu.memory_space<vmem>>, %arg2: memref<16x64xf32, #tpu.memory_space<vmem>>, %arg3: memref<1x64xf32, #tpu.memory_space<vmem>>, %arg4: memref<64x32xf32, #tpu.memory_space<vmem>>, %arg5: memref<1x32xf32, #tpu.memory_space<vmem>>, %arg6: memref<1x32xf32, #tpu.memory_space<vmem>>, %arg7: memref<1x1xf32, #tpu.memory_space<vmem>>, %arg8: memref<16x1xf32, #tpu.memory_space<vmem>>) attributes {dimension_semantics = [#tpu.dimension_semantics<parallel>], iteration_bounds = array<i64: 4>, scalar_prefetch = 0 : i64, scratch_operands = 0 : i64, tpu.core_type = #tpu.core_type<tc>, window_params = [{transform_indices = @transform_0, window_bounds = array<i64: 16, 16>}, {pipeline_mode = #tpu.pipeline_mode<synchronous>, transform_indices = @transform_1, window_bounds = array<i64: 16, 64>}, {pipeline_mode = #tpu.pipeline_mode<synchronous>, transform_indices = @transform_2, window_bounds = array<i64: 1, 64>}, {pipeline_mode = #tpu.pipeline_mode<synchronous>, transform_indices = @transform_3, window_bounds = array<i64: 64, 32>}, {pipeline_mode = #tpu.pipeline_mode<synchronous>, transform_indices = @transform_4, window_bounds = array<i64: 1, 32>}, {pipeline_mode = #tpu.pipeline_mode<synchronous>, transform_indices = @transform_5, window_bounds = array<i64: 1, 32>}, {pipeline_mode = #tpu.pipeline_mode<synchronous>, transform_indices = @transform_6, window_bounds = array<i64: 1, 1>}, {transform_indices = @transform_7, window_bounds = array<i64: 16, 1>}]} {
    %c0 = arith.constant 0 : index
    %c0_0 = arith.constant 0 : index
    %0 = vector.load %arg3[%c0, %c0_0] : memref<1x64xf32, #tpu.memory_space<vmem>>, vector<1x64xf32>
    %c0_1 = arith.constant 0 : index
    %c0_2 = arith.constant 0 : index
    %1 = vector.load %arg5[%c0_1, %c0_2] : memref<1x32xf32, #tpu.memory_space<vmem>>, vector<1x32xf32>
    %c0_3 = arith.constant 0 : index
    %c0_4 = arith.constant 0 : index
    %2 = vector.load %arg6[%c0_3, %c0_4] : memref<1x32xf32, #tpu.memory_space<vmem>>, vector<1x32xf32>
    %c0_5 = arith.constant 0 : index
    %c0_6 = arith.constant 0 : index
    %3 = vector.load %arg7[%c0_5, %c0_6] : memref<1x1xf32, #tpu.memory_space<vmem>>, vector<1x1xf32>
    %c0_7 = arith.constant 0 : index
    %c0_8 = arith.constant 0 : index
    %4 = vector.load %arg1[%c0_7, %c0_8] : memref<16x16xf32, #tpu.memory_space<vmem>>, vector<16x16xf32>
    %c0_9 = arith.constant 0 : index
    %c0_10 = arith.constant 0 : index
    %5 = vector.load %arg2[%c0_9, %c0_10] : memref<16x64xf32, #tpu.memory_space<vmem>>, vector<16x64xf32>
    %cst = arith.constant dense<0.000000e+00> : vector<16x64xf32>
    %6 = tpu.matmul %4, %5, %cst {dimension_numbers = #tpu.dot_dimension_numbers<[1], [0], [0], [1], [0, 0, 1, 1], [], []>} : vector<16x16xf32>, vector<16x64xf32>, vector<16x64xf32> -> vector<16x64xf32>
    %7 = vector.broadcast %0 : vector<1x64xf32> to vector<16x64xf32>
    %8 = arith.addf %6, %7 : vector<16x64xf32>
    %cst_11 = arith.constant 0.000000e+00 : f32
    %9 = vector.broadcast %cst_11 : f32 to vector<16x64xf32>
    %10 = arith.maximumf %8, %9 : vector<16x64xf32>
    %c0_12 = arith.constant 0 : index
    %c0_13 = arith.constant 0 : index
    %11 = vector.load %arg4[%c0_12, %c0_13] : memref<64x32xf32, #tpu.memory_space<vmem>>, vector<64x32xf32>
    %cst_14 = arith.constant dense<0.000000e+00> : vector<16x32xf32>
    %12 = tpu.matmul %10, %11, %cst_14 {dimension_numbers = #tpu.dot_dimension_numbers<[1], [0], [0], [1], [0, 0, 1, 1], [], []>} : vector<16x64xf32>, vector<64x32xf32>, vector<16x32xf32> -> vector<16x32xf32>
    %13 = vector.broadcast %1 : vector<1x32xf32> to vector<16x32xf32>
    %14 = arith.addf %12, %13 : vector<16x32xf32>
    %cst_15 = arith.constant 0.000000e+00 : f32
    %15 = vector.broadcast %cst_15 : f32 to vector<16x32xf32>
    %16 = arith.maximumf %14, %15 : vector<16x32xf32>
    %17 = vector.broadcast %2 : vector<1x32xf32> to vector<16x32xf32>
    %18 = arith.mulf %16, %17 : vector<16x32xf32>
    %cst_16 = arith.constant dense<0.000000e+00> : vector<16xf32>
    %19 = vector.multi_reduction <add>, %18, %cst_16 [1] : vector<16x32xf32> to vector<16xf32>
    %20 = vector.shape_cast %19 : vector<16xf32> to vector<16x1xf32>
    %21 = vector.broadcast %3 : vector<1x1xf32> to vector<16x1xf32>
    %22 = arith.addf %20, %21 : vector<16x1xf32>
    %cst_17 = arith.constant 0.000000e+00 : f32
    %23 = vector.broadcast %cst_17 : f32 to vector<16x1xf32>
    %24 = arith.subf %23, %22 : vector<16x1xf32>
    %25 = math.exp %24 : vector<16x1xf32>
    %cst_18 = arith.constant 1.000000e+00 : f32
    %26 = vector.broadcast %cst_18 : f32 to vector<16x1xf32>
    %27 = arith.addf %26, %25 : vector<16x1xf32>
    %28 = tpu.reciprocal %27 {approx = true} : vector<16x1xf32> -> vector<16x1xf32>
    %c0_19 = arith.constant 0 : index
    %c0_20 = arith.constant 0 : index
    %29 = vector.load %arg8[%c0_19, %c0_20] : memref<16x1xf32, #tpu.memory_space<vmem>>, vector<16x1xf32>
    tpu.vector_store %arg8[%c0_19, %c0_20], %28 {strides = array<i32>} : memref<16x1xf32, #tpu.memory_space<vmem>>, vector<16x1xf32>,
    return
  }
  func.func @transform_0(%arg0: i32) -> (i32, i32) {
    %c0_i32 = arith.constant 0 : i32
    %c0_i32_0 = arith.constant 0 : i32
    return %arg0, %c0_i32 : i32, i32
  }
  func.func @transform_1(%arg0: i32) -> (i32, i32) {
    %c0_i32 = arith.constant 0 : i32
    %c0_i32_0 = arith.constant 0 : i32
    %c0_i32_1 = arith.constant 0 : i32
    return %c0_i32, %c0_i32_0 : i32, i32
  }
  func.func @transform_2(%arg0: i32) -> (i32, i32) {
    %c0_i32 = arith.constant 0 : i32
    %c0_i32_0 = arith.constant 0 : i32
    %c0_i32_1 = arith.constant 0 : i32
    return %c0_i32, %c0_i32_0 : i32, i32
  }
  func.func @transform_3(%arg0: i32) -> (i32, i32) {
    %c0_i32 = arith.constant 0 : i32
    %c0_i32_0 = arith.constant 0 : i32
    %c0_i32_1 = arith.constant 0 : i32
    return %c0_i32, %c0_i32_0 : i32, i32
  }
  func.func @transform_4(%arg0: i32) -> (i32, i32) {
    %c0_i32 = arith.constant 0 : i32
    %c0_i32_0 = arith.constant 0 : i32
    %c0_i32_1 = arith.constant 0 : i32
    return %c0_i32, %c0_i32_0 : i32, i32
  }
  func.func @transform_5(%arg0: i32) -> (i32, i32) {
    %c0_i32 = arith.constant 0 : i32
    %c0_i32_0 = arith.constant 0 : i32
    %c0_i32_1 = arith.constant 0 : i32
    return %c0_i32, %c0_i32_0 : i32, i32
  }
  func.func @transform_6(%arg0: i32) -> (i32, i32) {
    %c0_i32 = arith.constant 0 : i32
    %c0_i32_0 = arith.constant 0 : i32
    %c0_i32_1 = arith.constant 0 : i32
    return %c0_i32, %c0_i32_0 : i32, i32
  }
  func.func @transform_7(%arg0: i32) -> (i32, i32) {
    %c0_i32 = arith.constant 0 : i32
    %c0_i32_0 = arith.constant 0 : i32
    return %arg0, %c0_i32 : i32, i32
  }
}

</mosaic_0001>

<llo_original>
// kernel: tpu_custom_call.1
$region0: #{tpu_custom_call.1}
  #allocation0 [shape = 'u32[]', space=smem, size = 0x4, offset = 0x4, fixed_abs, tag = 'smem constant byte address 0x4 - core index']
  #allocation1 [shape = 'u32[144,128]{1,0:T(1,128)}', space=vmem, size = 0x12000, scoped, tag = 'internal scratch']
  #allocation2 [shape = 'f32[1,1]{1,0:T(1,128)S(1)}', space=vmem, size = 0x200, scoped, tag = 'scoped memory for tpu_custom_call.1']
  %s0 = inlined_call_operand.vmem [shape: f32[64,16], index: 0, kind: input, shape index: {}]
  %s1 = inlined_call_operand.vmem [shape: f32[16,64], index: 1, kind: input, shape index: {}]
  %s2 = inlined_call_operand.vmem [shape: f32[1,64], index: 2, kind: input, shape index: {}]
  %s3 = inlined_call_operand.vmem [shape: f32[64,32], index: 3, kind: input, shape index: {}]
  %s4 = inlined_call_operand.vmem [shape: f32[1,32], index: 4, kind: input, shape index: {}]
  %s5 = inlined_call_operand.vmem [shape: f32[1,32], index: 5, kind: input, shape index: {}]
  %s6 = inlined_call_operand.<no memory space> [shape: f32[1,1], index: 6, kind: input, shape index: {}]
  %s7 = inlined_call_operand.vmem [shape: f32[64,1], index: 7, kind: output, shape index: {}]
  %s8 = sld [smem:[#allocation0]]
  $region61: #{tpu_custom_call.1} parent=0
    _
  %s10 = ssub.s32 1, %s8
  %s11 = scalar_select 0, %s10, %s8
  %v12 = vstv %s6
  %13 = vst [vmem:[#allocation2] sm:$0x1] %v12
  loop: start=0, step=1, limit=6
  $region2: #{tpu_custom_call.1} parent=0 // loop_pre_header
    _
  $region3: #{tpu_custom_call.1} parent=0 // loop_header
    %s15 = sphi 0, %s19
    %p16 = scmp.ge.s32.totalorder %s15, 6
    %s25 = sphi 0, %s27
    %s28 = sphi 0, %s25
    %s29 = sphi 0, %s28
    %s45 = sphi 0, %s29
    %s49 = sphi 0, %s49
    %s51 = sphi 0, %s49
    %s52 = sphi 0, %s51
    %s66 = sphi 0, %s52
    %s70 = sphi 0, %s70
    %s72 = sphi 0, %s70
    %s73 = sphi 0, %s72
    %s87 = sphi 0, %s73
    %s91 = sphi 0, %s91
    %s93 = sphi 0, %s91
    %s94 = sphi 0, %s93
    %s108 = sphi 0, %s94
    %s112 = sphi 0, %s112
    %s114 = sphi 0, %s112
    %s115 = sphi 0, %s114
    %s129 = sphi 0, %s115
    %s133 = sphi 0, %s133
    %s135 = sphi 0, %s133
    %s136 = sphi 0, %s135
    %s150 = sphi 0, %s136
    %s154 = sphi 0, %s154
    %s156 = sphi 0, %s154
    %s157 = sphi 0, %s156
    %s171 = sphi 0, %s157
    %s177 = sphi 0, %s179
    %s180 = sphi 0, %s177
    %s181 = sphi 0, %s180
    %s197 = sphi 0, %s181
  $region4: #{tpu_custom_call.1} parent=0 // loop_header_branch
    %18 = sbr.rel (%p16) target = $region8
  $region5: #{tpu_custom_call.1} parent=0 // loop_body
    %s20 = ssub.s32 %s15, 1
    %s21 = ssub.s32 %s15, 2
    %s22 = sadd.s32 %s15, 1
    %s23 = ssub.s32 %s15, %s22
    %p24 = scmp.eq.s32.totalorder %s23, 0
    %s26 = sadd.s32 %s25, 1
    %s27 = scalar_select %p24, %s25, %s26
    %p30 = pneg %p24
    %p31 = scmp.eq.s32.totalorder %s15, 3
    %p32 = por %p30, %p31
    %p33 = scmp.ne.s32.totalorder %s25, %s28
    %p34 = scmp.eq.s32.totalorder %s15, 0
    %p35 = por %p33, %p34
    %p36 = scmp.ne.s32.totalorder %s25, %s28
    %p37 = scmp.eq.s32.totalorder %s20, 3
    %p38 = por %p36, %p37
    %p39 = scmp.ne.s32.totalorder %s28, %s29
    %p40 = scmp.eq.s32.totalorder %s20, 0
    %p41 = por %p39, %p40
    %p42 = scmp.ne.s32.totalorder %s28, %s29
    %p43 = scmp.eq.s32.totalorder %s21, 3
    %p44 = por %p42, %p43
    %p46 = scmp.ne.s32.totalorder %s29, %s45
    %p47 = scmp.eq.s32.totalorder %s21, 0
    %p48 = por %p46, %p47
    %s50 = sadd.s32 %s49, 1
    %p53 = scmp.eq.s32.totalorder %s15, 3
    %p54 = scmp.ne.s32.totalorder %s49, %s51
    %p55 = scmp.eq.s32.totalorder %s15, 0
    %p56 = por %p54, %p55
    %p57 = scmp.ne.s32.totalorder %s49, %s51
    %p58 = scmp.eq.s32.totalorder %s20, 3
    %p59 = por %p57, %p58
    %p60 = scmp.ne.s32.totalorder %s51, %s52
    %p61 = scmp.eq.s32.totalorder %s20, 0
    %p62 = por %p60, %p61
    %p63 = scmp.ne.s32.totalorder %s51, %s52
    %p64 = scmp.eq.s32.totalorder %s21, 3
    %p65 = por %p63, %p64
    %p67 = scmp.ne.s32.totalorder %s52, %s66
    %p68 = scmp.eq.s32.totalorder %s21, 0
    %p69 = por %p67, %p68
    %s71 = sadd.s32 %s70, 1
    %p74 = scmp.eq.s32.totalorder %s15, 3
    %p75 = scmp.ne.s32.totalorder %s70, %s72
    %p76 = scmp.eq.s32.totalorder %s15, 0
    %p77 = por %p75, %p76
    %p78 = scmp.ne.s32.totalorder %s70, %s72
    %p79 = scmp.eq.s32.totalorder %s20, 3
    %p80 = por %p78, %p79
    %p81 = scmp.ne.s32.totalorder %s72, %s73
    %p82 = scmp.eq.s32.totalorder %s20, 0
    %p83 = por %p81, %p82
    %p84 = scmp.ne.s32.totalorder %s72, %s73
    %p85 = scmp.eq.s32.totalorder %s21, 3
    %p86 = por %p84, %p85
    %p88 = scmp.ne.s32.totalorder %s73, %s87
    %p89 = scmp.eq.s32.totalorder %s21, 0
    %p90 = por %p88, %p89
    %s92 = sadd.s32 %s91, 1
    %p95 = scmp.eq.s32.totalorder %s15, 3
    %p96 = scmp.ne.s32.totalorder %s91, %s93
    %p97 = scmp.eq.s32.totalorder %s15, 0
    %p98 = por %p96, %p97
    %p99 = scmp.ne.s32.totalorder %s91, %s93
    %p100 = scmp.eq.s32.totalorder %s20, 3
    %p101 = por %p99, %p100
    %p102 = scmp.ne.s32.totalorder %s93, %s94
    %p103 = scmp.eq.s32.totalorder %s20, 0
    %p104 = por %p102, %p103
    %p105 = scmp.ne.s32.totalorder %s93, %s94
    %p106 = scmp.eq.s32.totalorder %s21, 3
    %p107 = por %p105, %p106
    %p109 = scmp.ne.s32.totalorder %s94, %s108
    %p110 = scmp.eq.s32.totalorder %s21, 0
    %p111 = por %p109, %p110
    %s113 = sadd.s32 %s112, 1
    %p116 = scmp.eq.s32.totalorder %s15, 3
    %p117 = scmp.ne.s32.totalorder %s112, %s114
    %p118 = scmp.eq.s32.totalorder %s15, 0
    %p119 = por %p117, %p118
    %p120 = scmp.ne.s32.totalorder %s112, %s114
    %p121 = scmp.eq.s32.totalorder %s20, 3
    %p122 = por %p120, %p121
    %p123 = scmp.ne.s32.totalorder %s114, %s115
    %p124 = scmp.eq.s32.totalorder %s20, 0
    %p125 = por %p123, %p124
    %p126 = scmp.ne.s32.totalorder %s114, %s115
    %p127 = scmp.eq.s32.totalorder %s21, 3
    %p128 = por %p126, %p127
    %p130 = scmp.ne.s32.totalorder %s115, %s129
    %p131 = scmp.eq.s32.totalorder %s21, 0
    %p132 = por %p130, %p131
    %s134 = sadd.s32 %s133, 1
    %p137 = scmp.eq.s32.totalorder %s15, 3
    %p138 = scmp.ne.s32.totalorder %s133, %s135
    %p139 = scmp.eq.s32.totalorder %s15, 0
    %p140 = por %p138, %p139
    %p141 = scmp.ne.s32.totalorder %s133, %s135
    %p142 = scmp.eq.s32.totalorder %s20, 3
    %p143 = por %p141, %p142
    %p144 = scmp.ne.s32.totalorder %s135, %s136
    %p145 = scmp.eq.s32.totalorder %s20, 0
    %p146 = por %p144, %p145
    %p147 = scmp.ne.s32.totalorder %s135, %s136
    %p148 = scmp.eq.s32.totalorder %s21, 3
    %p149 = por %p147, %p148
    %p151 = scmp.ne.s32.totalorder %s136, %s150
    %p152 = scmp.eq.s32.totalorder %s21, 0
    %p153 = por %p151, %p152
    %s155 = sadd.s32 %s154, 1
    %p158 = scmp.eq.s32.totalorder %s15, 3
    %p159 = scmp.ne.s32.totalorder %s154, %s156
    %p160 = scmp.eq.s32.totalorder %s15, 0
    %p161 = por %p159, %p160
    %p162 = scmp.ne.s32.totalorder %s154, %s156
    %p163 = scmp.eq.s32.totalorder %s20, 3
    %p164 = por %p162, %p163
    %p165 = scmp.ne.s32.totalorder %s156, %s157
    %p166 = scmp.eq.s32.totalorder %s20, 0
    %p167 = por %p165, %p166
    %p168 = scmp.ne.s32.totalorder %s156, %s157
    %p169 = scmp.eq.s32.totalorder %s21, 3
    %p170 = por %p168, %p169
    %p172 = scmp.ne.s32.totalorder %s157, %s171
    %p173 = scmp.eq.s32.totalorder %s21, 0
    %p174 = por %p172, %p173
    %s175 = ssub.s32 %s15, %s22
    %p176 = scmp.eq.s32.totalorder %s175, 0
    %s178 = sadd.s32 %s177, 1
    %s179 = scalar_select %p176, %s177, %s178
    %p182 = pneg %p176
    %p183 = scmp.eq.s32.totalorder %s15, 3
    %p184 = por %p182, %p183
    %p185 = scmp.ne.s32.totalorder %s177, %s180
    %p186 = scmp.eq.s32.totalorder %s15, 0
    %p187 = por %p185, %p186
    %p188 = scmp.ne.s32.totalorder %s177, %s180
    %p189 = scmp.eq.s32.totalorder %s20, 3
    %p190 = por %p188, %p189
    %p191 = scmp.ne.s32.totalorder %s180, %s181
    %p192 = scmp.eq.s32.totalorder %s20, 0
    %p193 = por %p191, %p192
    %p194 = scmp.ne.s32.totalorder %s180, %s181
    %p195 = scmp.eq.s32.totalorder %s21, 3
    %p196 = por %p194, %p195
    %p198 = scmp.ne.s32.totalorder %s181, %s197
    %p199 = scmp.eq.s32.totalorder %s21, 0
    %p200 = por %p198, %p199
    %p201 = scmp.le.s32.totalorder 1, %s15
    %p202 = scmp.lt.s32.totalorder %s15, 5
    %p203 = pnand %p201, %p202
    %p204 = pneg %p203
    // Predicated region
    $region9: #{tpu_custom_call.1} parent=5 // pred_check
      _
    $region10: #{tpu_custom_call.1} parent=5 // pred_check_branch
      %206 = sbr.rel (%p203) target = $region12
    $region11: #{tpu_custom_call.1} parent=5 // pred_region
      %s207 = ssub.s32 %s15, 1
      // Predicated region
      $region13: #{tpu_custom_call.1} parent=11 // pred_check
        %p208 = pneg %p62
      $region14: #{tpu_custom_call.1} parent=11 // pred_check_branch
        %210 = sbr.rel (%p208) target = $region16
      $region15: #{tpu_custom_call.1} parent=11 // pred_region
        _
      $region16: #{tpu_custom_call.1} parent=11 // pred_fallthru
        _
      // Predicated region
      $region17: #{tpu_custom_call.1} parent=11 // pred_check
        %p211 = pneg %p83
      $region18: #{tpu_custom_call.1} parent=11 // pred_check_branch
        %213 = sbr.rel (%p211) target = $region20
      $region19: #{tpu_custom_call.1} parent=11 // pred_region
        _
      $region20: #{tpu_custom_call.1} parent=11 // pred_fallthru
        _
      // Predicated region
      $region21: #{tpu_custom_call.1} parent=11 // pred_check
        %p214 = pneg %p104
      $region22: #{tpu_custom_call.1} parent=11 // pred_check_branch
        %216 = sbr.rel (%p214) target = $region24
      $region23: #{tpu_custom_call.1} parent=11 // pred_region
        _
      $region24: #{tpu_custom_call.1} parent=11 // pred_fallthru
        _
      // Predicated region
      $region25: #{tpu_custom_call.1} parent=11 // pred_check
        %p217 = pneg %p125
      $region26: #{tpu_custom_call.1} parent=11 // pred_check_branch
        %219 = sbr.rel (%p217) target = $region28
      $region27: #{tpu_custom_call.1} parent=11 // pred_region
        _
      $region28: #{tpu_custom_call.1} parent=11 // pred_fallthru
        _
      // Predicated region
      $region29: #{tpu_custom_call.1} parent=11 // pred_check
        %p220 = pneg %p146
      $region30: #{tpu_custom_call.1} parent=11 // pred_check_branch
        %222 = sbr.rel (%p220) target = $region32
      $region31: #{tpu_custom_call.1} parent=11 // pred_region
        _
      $region32: #{tpu_custom_call.1} parent=11 // pred_fallthru
        _
      // Predicated region
      $region33: #{tpu_custom_call.1} parent=11 // pred_check
        %p223 = pneg %p167
      $region34: #{tpu_custom_call.1} parent=11 // pred_check_branch
        %225 = sbr.rel (%p223) target = $region36
      $region35: #{tpu_custom_call.1} parent=11 // pred_region
        _
      $region36: #{tpu_custom_call.1} parent=11 // pred_fallthru
        _
    $region12: #{tpu_custom_call.1} parent=5 // pred_fallthru
      _
    %p226 = scmp.lt.s32.totalorder %s15, 4
    // Predicated region
    $region37: #{tpu_custom_call.1} parent=5 // pred_check
      %p227 = pneg %p226
    $region38: #{tpu_custom_call.1} parent=5 // pred_check_branch
      %229 = sbr.rel (%p227) target = $region40
    $region39: #{tpu_custom_call.1} parent=5 // pred_region
      // Predicated region
      $region41: #{tpu_custom_call.1} parent=39 // pred_check
        %p230 = pneg %p35
      $region42: #{tpu_custom_call.1} parent=39 // pred_check_branch
        %232 = sbr.rel (%p230) target = $region44
      $region43: #{tpu_custom_call.1} parent=39 // pred_region
        %s233 = smul.u32 2, %s15
        %p234 = scmp.lt.s32.totalorder %s233, 7
        %s235 = scalar_select %p234, %s233, 7
        %s236 = smul.addr %s235, 8
        %s237 = scalar_lea.vmem %s0, %s236
        %s238 = smul.u32 2, %s15
      $region44: #{tpu_custom_call.1} parent=39 // pred_fallthru
        _
    $region40: #{tpu_custom_call.1} parent=5 // pred_fallthru
      _
    %p239 = scmp.le.s32.totalorder 1, %s15
    %p240 = scmp.lt.s32.totalorder %s15, 5
    %p241 = pnand %p239, %p240
    %p242 = pneg %p241
    // Predicated region
    $region45: #{tpu_custom_call.1} parent=5 // pred_check
      _
    $region46: #{tpu_custom_call.1} parent=5 // pred_check_branch
      %244 = sbr.rel (%p241) target = $region48
    $region47: #{tpu_custom_call.1} parent=5 // pred_region
      %s245 = ssub.s32 %s15, 1
      %s246 = smul.u32 2, %s20
      %p247 = scmp.lt.s32.totalorder %s246, 7
      %s248 = scalar_select %p247, %s246, 7
      %s249 = smul.addr %s248, 8
      %s250 = scalar_lea.vmem %s0, %s249
      %p251 = pneg %p41
      %p252 = pneg %p38
      %p253 = pneg %p62
      %p254 = pneg %p59
      %p255 = pneg %p83
      %p256 = pneg %p80
      %p257 = pneg %p104
      %p258 = pneg %p101
      %p259 = pneg %p125
      %p260 = pneg %p122
      %p261 = pneg %p146
      %p262 = pneg %p143
      %p263 = pneg %p167
      %p264 = pneg %p164
      %p265 = pneg %p193
      %p266 = pneg %p190
      %s267 = smul.u32 2, %s20
      %p268 = scmp.lt.s32.totalorder %s267, 7
      %s269 = scalar_select %p268, %s267, 7
      %s270 = smul.addr %s269, 8
      %s271 = scalar_lea.vmem %s7, %s270
      %s272 = smul.u32 2, %s20
      %p273 = scmp.lt.s32.totalorder %s272, 7
      %s274 = scalar_select %p273, %s272, 7
      %s275 = smul.addr %s274, 8
      %s276 = scalar_lea.vmem %s0, %s275
      %s277 = smul.u32 2, %s20
      %s278 = smul.u32 2, %s20
      %p279 = scmp.lt.s32.totalorder %s278, 7
      %s280 = scalar_select %p279, %s278, 7
      %s281 = smul.addr %s280, 8
      %s282 = scalar_lea.vmem %s7, %s281
      %s283 = smul.u32 2, %s20
      %v284 = vld [vmem:[%s2] sm:$0x1]
      %v285 = vld [vmem:[%s4] sm:$0x1]
      %v286 = vld [vmem:[%s5] sm:$0x1]
      %v287 = vld [vmem:[#allocation2] sm:$0x1]
      %v288 = vld [vmem:[%s276] sm:$0xff]
      %v289 = vld [vmem:[%s276 + $0x8] sm:$0xff]
      %v290 = vld [vmem:[%s1] sm:$0xff]
      %v291 = vld [vmem:[%s1 + $0x8] sm:$0xff]
      %v293 = vlaneseq
      %v294 = vshrl.u32 %v293, 7
      %v295 = vsub.s32 0, %v294
      %v296 = vrot.slane %v284, %v295
      %vm298 = vcmask 130048
      %v300 = vsel %vm298, %v288, 0
      %v303 = vsel %vm298, %v289, 0
      %305 = vmatprep.subr.mxu0 0.0
      %306 = vmatpush1.msra.mxu0 0.0
      %307 = vmatprep.subr.mxu0 0.0
      %308 = vmatpush1.msra.mxu0 0.0
      %309 = vmatprep.subr.mxu0 0.0
      %310 = vmatpush1.msra.mxu0 0.0
      %311 = vmatprep.subr.mxu0 0.0
      %312 = vmatpush1.msra.mxu0 0.0
      %313 = vmatprep.subr.mxu0 0.0
      %314 = vmatpush1.msra.mxu0 0.0
      %315 = vmatprep.subr.mxu0 0.0
      %316 = vmatpush1.msra.mxu0 0.0
      %317 = vmatprep.subr.mxu0 0.0
      %318 = vmatpush1.msra.mxu0 0.0
      %319 = vmatprep.subr.mxu0 0.0
      %320 = vmatpush1.msra.mxu0 0.0
      %321 = vmatprep.subr.mxu0 0.0
      %322 = vmatpush1.msra.mxu0 0.0
      %323 = vmatprep.subr.mxu0 0.0
      %324 = vmatpush1.msra.mxu0 0.0
      %325 = vmatprep.subr.mxu0 0.0
      %326 = vmatpush1.msra.mxu0 0.0
      %327 = vmatprep.subr.mxu0 0.0
      %328 = vmatpush1.msra.mxu0 0.0
      %329 = vmatprep.subr.mxu0 0.0
      %330 = vmatpush1.msra.mxu0 0.0
      %331 = vmatprep.subr.mxu0 0.0
      %332 = vmatpush1.msra.mxu0 0.0
      %333 = vmatprep.subr.mxu0 0.0
      %334 = vmatpush1.msra.mxu0 %v291
      %335 = vmatprep.subr.mxu0 0.0
      %336 = vmatpush1.msra.mxu0 %v290
      %337 = vmatprep.subr.mxu0 0.0
      %338 = vmatpush2.msra.mxu0 0.0
      %339 = vmatprep.subr.mxu0 0.0
      %340 = vmatpush2.msra.mxu0 0.0
      %341 = vmatprep.subr.mxu0 0.0
      %342 = vmatpush2.msra.mxu0 0.0
      %343 = vmatprep.subr.mxu0 0.0
      %344 = vmatpush2.msra.mxu0 0.0
      %345 = vmatprep.subr.mxu0 0.0
      %346 = vmatpush2.msra.mxu0 0.0
      %347 = vmatprep.subr.mxu0 0.0
      %348 = vmatpush2.msra.mxu0 0.0
      %349 = vmatprep.subr.mxu0 0.0
      %350 = vmatpush2.msra.mxu0 0.0
      %351 = vmatprep.subr.mxu0 0.0
      %352 = vmatpush2.msra.mxu0 0.0
      %353 = vmatprep.subr.mxu0 0.0
      %354 = vmatpush2.msra.mxu0 0.0
      %355 = vmatprep.subr.mxu0 0.0
      %356 = vmatpush2.msra.mxu0 0.0
      %357 = vmatprep.subr.mxu0 0.0
      %358 = vmatpush2.msra.mxu0 0.0
      %359 = vmatprep.subr.mxu0 0.0
      %360 = vmatpush2.msra.mxu0 0.0
      %361 = vmatprep.subr.mxu0 0.0
      %362 = vmatpush2.msra.mxu0 0.0
      %363 = vmatprep.subr.mxu0 0.0
      %364 = vmatpush2.msra.mxu0 0.0
      %365 = vmatprep.subr.mxu0 0.0
      %366 = vmatpush2.msra.mxu0 0.0
      %367 = vmatprep.subr.mxu0 0.0
      %368 = vmatpush2.msra.mxu0 0.0
      %369 = vmatprep.mubr.f32.mxu0 0.0
      %370 = vmatmul.mubr.f32.gmra.mxu0 %v300
      %v371 = vpop.f32.mrf.mxu0
      %v372 = vadd.f32 %v296, %v371
      %v373 = vpop.f32.mrf.mxu0
      %374 = vmatprep.mubr.f32.mxu0 0.0
      %375 = vmatmul.mubr.f32.gmra.mxu0 %v303
      %v376 = vpop.f32.mrf.mxu0
      %v377 = vadd.f32 %v296, %v376
      %v378 = vpop.f32.mrf.mxu0
      %379 = vdwg.mxu0
      %v380 = vmax.f32 %v372, 0.0
      %v381 = vmax.f32 %v377, 0.0
      %v382 = vld [vmem:[%s3] sm:$0xff]
      %v383 = vld [vmem:[%s3 + $0x8] sm:$0xff]
      %v384 = vld [vmem:[%s3 + $0x10] sm:$0xff]
      %v385 = vld [vmem:[%s3 + $0x18] sm:$0xff]
      %v386 = vld [vmem:[%s3 + $0x20] sm:$0xff]
      %v387 = vld [vmem:[%s3 + $0x28] sm:$0xff]
      %v388 = vld [vmem:[%s3 + $0x30] sm:$0xff]
      %v389 = vld [vmem:[%s3 + $0x38] sm:$0xff]
      %v391 = vlaneseq
      %v392 = vshrl.u32 %v391, 7
      %v393 = vsub.s32 0, %v392
      %v394 = vrot.slane %v285, %v393
      %vm396 = vcmask 523264
      %v398 = vsel %vm396, %v380, 0
      %v401 = vsel %vm396, %v381, 0
      %403 = vmatprep.subr.mxu0 0.0
      %404 = vmatpush1.msra.mxu0 0.0
      %405 = vmatprep.subr.mxu0 0.0
      %406 = vmatpush1.msra.mxu0 0.0
      %407 = vmatprep.subr.mxu0 0.0
      %408 = vmatpush1.msra.mxu0 0.0
      %409 = vmatprep.subr.mxu0 0.0
      %410 = vmatpush1.msra.mxu0 0.0
      %411 = vmatprep.subr.mxu0 0.0
      %412 = vmatpush1.msra.mxu0 0.0
      %413 = vmatprep.subr.mxu0 0.0
      %414 = vmatpush1.msra.mxu0 0.0
      %415 = vmatprep.subr.mxu0 0.0
      %416 = vmatpush1.msra.mxu0 0.0
      %417 = vmatprep.subr.mxu0 0.0
      %418 = vmatpush1.msra.mxu0 0.0
      %419 = vmatprep.subr.mxu0 0.0
      %420 = vmatpush1.msra.mxu0 %v389
      %421 = vmatprep.subr.mxu0 0.0
      %422 = vmatpush1.msra.mxu0 %v388
      %423 = vmatprep.subr.mxu0 0.0
      %424 = vmatpush1.msra.mxu0 %v387
      %425 = vmatprep.subr.mxu0 0.0
      %426 = vmatpush1.msra.mxu0 %v386
      %427 = vmatprep.subr.mxu0 0.0
      %428 = vmatpush1.msra.mxu0 %v385
      %429 = vmatprep.subr.mxu0 0.0
      %430 = vmatpush1.msra.mxu0 %v384
      %431 = vmatprep.subr.mxu0 0.0
      %432 = vmatpush1.msra.mxu0 %v383
      %433 = vmatprep.subr.mxu0 0.0
      %434 = vmatpush1.msra.mxu0 %v382
      %435 = vmatprep.subr.mxu0 0.0
      %436 = vmatpush2.msra.mxu0 0.0
      %437 = vmatprep.subr.mxu0 0.0
      %438 = vmatpush2.msra.mxu0 0.0
      %439 = vmatprep.subr.mxu0 0.0
      %440 = vmatpush2.msra.mxu0 0.0
      %441 = vmatprep.subr.mxu0 0.0
      %442 = vmatpush2.msra.mxu0 0.0
      %443 = vmatprep.subr.mxu0 0.0
      %444 = vmatpush2.msra.mxu0 0.0
      %445 = vmatprep.subr.mxu0 0.0
      %446 = vmatpush2.msra.mxu0 0.0
      %447 = vmatprep.subr.mxu0 0.0
      %448 = vmatpush2.msra.mxu0 0.0
      %449 = vmatprep.subr.mxu0 0.0
      %450 = vmatpush2.msra.mxu0 0.0
      %451 = vmatprep.subr.mxu0 0.0
      %452 = vmatpush2.msra.mxu0 0.0
      %453 = vmatprep.subr.mxu0 0.0
      %454 = vmatpush2.msra.mxu0 0.0
      %455 = vmatprep.subr.mxu0 0.0
      %456 = vmatpush2.msra.mxu0 0.0
      %457 = vmatprep.subr.mxu0 0.0
      %458 = vmatpush2.msra.mxu0 0.0
      %459 = vmatprep.subr.mxu0 0.0
      %460 = vmatpush2.msra.mxu0 0.0
      %461 = vmatprep.subr.mxu0 0.0
      %462 = vmatpush2.msra.mxu0 0.0
      %463 = vmatprep.subr.mxu0 0.0
      %464 = vmatpush2.msra.mxu0 0.0
      %465 = vmatprep.subr.mxu0 0.0
      %466 = vmatpush2.msra.mxu0 0.0
      %467 = vmatprep.mubr.f32.mxu0 0.0
      %468 = vmatmul.mubr.f32.gmra.mxu0 %v398
      %v469 = vpop.f32.mrf.mxu0
      %v470 = vadd.f32 %v394, %v469
      %v471 = vpop.f32.mrf.mxu0
      %472 = vmatprep.mubr.f32.mxu0 0.0
      %473 = vmatmul.mubr.f32.gmra.mxu0 %v401
      %v474 = vpop.f32.mrf.mxu0
      %v475 = vadd.f32 %v394, %v474
      %v476 = vpop.f32.mrf.mxu0
      %477 = vdwg.mxu0
      %v478 = vmax.f32 %v470, 0.0
      %v479 = vmax.f32 %v475, 0.0
      %v481 = vlaneseq
      %v482 = vshrl.u32 %v481, 7
      %v483 = vsub.s32 0, %v482
      %v484 = vrot.slane %v286, %v483
      %v486 = vmul.f32 %v478, %v484
      %v487 = vmul.f32 %v479, %v484
      %vm488 = vcmask 261120
      %v489 = vsel %vm488, %v486, 0.0
      %490 = vadd.xlane.f32.xlu0 %v489
      %v491 = vpop.xlane.xlu0 %490
      %v492 = vsel %vm488, %v487, 0.0
      %493 = vadd.xlane.f32.xlu0 %v492
      %v494 = vpop.xlane.xlu0 %493
      %v496 = vlaneseq
      %v497 = vshrl.u32 %v496, 7
      %v498 = vsub.s32 0, %v497
      %v499 = vrot.slane %v287, %v498
      %v501 = vadd.f32 %v491, %v499
      %v502 = vadd.f32 %v494, %v499
      %v503 = vsub.f32 0.0, %v501
      %v504 = vsub.f32 0.0, %v502
      %v505 = vmul.f32 %v503, 1.442695
      %v506 = vpow.pop %v505
      %v507 = vmul.f32 %v504, 1.442695
      %v508 = vpow.pop %v507
      %v509 = vadd.f32 %v506, 1.0
      %v510 = vadd.f32 %v508, 1.0
      %v511 = vrcp.pop %v509
      %v512 = vrcp.pop %v510
      %vm513 = vcmask 7168
      %514 = vst.msk [vmem:[%s282] sm:$0xff] %vm513, %v511
      %515 = vst.msk [vmem:[%s282 + $0x8] sm:$0xff] %vm513, %v512
      %s516 = smul.u32 2, %s20
      %p517 = scmp.lt.s32.totalorder %s516, 7
      %s518 = scalar_select %p517, %s516, 7
      %s519 = smul.addr %s518, 8
      %s520 = scalar_lea.vmem %s7, %s519
      // Predicated region
      $region49: #{tpu_custom_call.1} parent=47 // pred_check
        %p521 = pneg %p190
      $region50: #{tpu_custom_call.1} parent=47 // pred_check_branch
        %523 = sbr.rel (%p521) target = $region52
      $region51: #{tpu_custom_call.1} parent=47 // pred_region
        %s524 = smul.u32 2, %s20
      $region52: #{tpu_custom_call.1} parent=47 // pred_fallthru
        _
    $region48: #{tpu_custom_call.1} parent=5 // pred_fallthru
      _
    %p525 = scmp.le.s32.totalorder 2, %s15
    // Predicated region
    $region53: #{tpu_custom_call.1} parent=5 // pred_check
      %p526 = pneg %p525
    $region54: #{tpu_custom_call.1} parent=5 // pred_check_branch
      %528 = sbr.rel (%p526) target = $region56
    $region55: #{tpu_custom_call.1} parent=5 // pred_region
      %s529 = ssub.s32 %s15, 2
      // Predicated region
      $region57: #{tpu_custom_call.1} parent=55 // pred_check
        %p530 = pneg %p196
      $region58: #{tpu_custom_call.1} parent=55 // pred_check_branch
        %532 = sbr.rel (%p530) target = $region60
      $region59: #{tpu_custom_call.1} parent=55 // pred_region
        %s533 = smul.u32 2, %s21
        %p534 = scmp.lt.s32.totalorder %s533, 7
        %s535 = scalar_select %p534, %s533, 7
        %s536 = smul.addr %s535, 8
        %s537 = scalar_lea.vmem %s7, %s536
      $region60: #{tpu_custom_call.1} parent=55 // pred_fallthru
        _
    $region56: #{tpu_custom_call.1} parent=5 // pred_fallthru
      _
  $region6: #{tpu_custom_call.1} parent=0 // loop_footer
    %s19 = sadd.s32 1, %s15
  $region7: #{tpu_custom_call.1} parent=0 // loop_footer_branch
    %14 = sbr.rel target = $region3
  $region8: #{tpu_custom_call.1} parent=0 // loop_exit
    _

</llo_original>
